<compile_context>
chip_gen: v7x
topology: tpu7x:2x2x1
jax: 0.10.0
libtpu: 0.0.40
codegen_flags: <defaults>
</compile_context>

<pallas_src>
import functools

import jax
import jax.numpy as jnp
from jax.experimental import pallas as pl
from jax.experimental.pallas import tpu as pltpu


def _attention_kernel(x_ref, wq_ref, wk_ref, wv_ref, wp_ref, b_ref,
                      o_ref, acc_ref, *, scale):
    bt, n, c = x_ref.shape
    d = wq_ref.shape[-1]
    rows = bt * n
    cdt = x_ref.dtype                      # compute dtype for MXU operands

    h = pl.program_id(1)

    @pl.when(h == 0)
    def _():
        acc_ref[...] = jnp.zeros_like(acc_ref)

    xr = x_ref[...].reshape(rows, c)       # (R, C)   leading-dim merge only
    wq = wq_ref[0]                         # (C, D)   this head's Q projection
    wk = wk_ref[0]                         # (C, D)
    wv = wv_ref[0]                         # (C, D)
    wp = wp_ref[0]                         # (D, C)   this head's proj rows

    # Per-head Q/K/V projections: plain 2-D matmuls, f32 accumulate.
    q = jnp.dot(xr, wq, preferred_element_type=jnp.float32)       # (R, D)
    k = jnp.dot(xr, wk, preferred_element_type=jnp.float32)       # (R, D)
    v = jnp.dot(xr, wv, preferred_element_type=jnp.float32)       # (R, D)

    # Fold the scale into q (cheaper than scaling the (N,N) scores), then cast
    # MXU operands back to the input dtype (no-op for f32 inputs).
    q3 = (q * scale).reshape(bt, n, d).astype(cdt)
    k3 = k.reshape(bt, n, d).astype(cdt)
    v3 = v.reshape(bt, n, d).astype(cdt)

    # Scores + softmax (statistics in f32).
    s = jnp.einsum('bnd,bmd->bnm', q3, k3,
                   preferred_element_type=jnp.float32)            # (Bt, N, N)
    s = s - jnp.max(s, axis=-1, keepdims=True)
    p = jnp.exp(s)
    inv = pl.reciprocal(jnp.sum(p, axis=-1, keepdims=True), approx=True)
    p = (p * inv).astype(cdt)
    # attn_drop has p=0.0 -> identity (eval-mode / no-op)

    o = jnp.einsum('bnm,bmd->bnd', p, v3,
                   preferred_element_type=jnp.float32)            # (Bt, N, D)
    o2 = o.reshape(rows, d).astype(cdt)

    # Per-head slice of the output projection; summing over heads reproduces
    # concat(heads) @ Wproj.
    acc_ref[...] += jnp.dot(o2, wp, preferred_element_type=jnp.float32)

    @pl.when(h == pl.num_programs(1) - 1)
    def _():
        y = acc_ref[...] + b_ref[...]      # single (1, C) bias broadcast
        # proj_drop has p=0.0 -> identity
        o_ref[...] = y.reshape(bt, n, c).astype(o_ref.dtype)


def _pick_batch_block(batch, seq, target_rows=128):
    """Rows per step ~target_rows, while keeping >=2 parallel batch blocks."""
    cap = max(1, target_rows // max(seq, 1))
    if batch >= 2:
        cap = min(cap, max(1, batch // 2))
    bt = 1
    for cand in range(1, min(batch, cap) + 1):
        if batch % cand == 0:
            bt = cand
    return bt


def attention_forward(x, w_qkv, w_proj, b_proj, num_heads, batch_block=None):
    """x: (B, N, C); w_qkv: (C, 3C); w_proj: (C, C); b_proj: (C,)."""
    B, N, C = x.shape
    H = num_heads
    D = C // H
    scale = D ** (-0.5)

    bt = batch_block if batch_block is not None else _pick_batch_block(B, N)
    assert B % bt == 0, "batch_block must divide batch"
    nb = B // bt

    dt = x.dtype
    # Head-major weight layouts prepared once in the wrapper (plain XLA ops):
    #   wq/wk/wv: (H, C, D) so wq[h] is this head's (C, D) projection,
    #   wp:       (H, D, C) so wp[h] is this head's slice of Wproj's rows.
    wq = w_qkv[:, :C].reshape(C, H, D).transpose(1, 0, 2).astype(dt)
    wk = w_qkv[:, C:2 * C].reshape(C, H, D).transpose(1, 0, 2).astype(dt)
    wv = w_qkv[:, 2 * C:].reshape(C, H, D).transpose(1, 0, 2).astype(dt)
    wp = w_proj.reshape(H, D, C).astype(dt)
    bp = b_proj.reshape(1, C).astype(jnp.float32)

    kernel = functools.partial(_attention_kernel, scale=scale)

    return pl.pallas_call(
        kernel,
        out_shape=jax.ShapeDtypeStruct((B, N, C), x.dtype),
        grid_spec=pltpu.PrefetchScalarGridSpec(
            num_scalar_prefetch=0,
            grid=(nb, H),                         # heads = reduction axis, last
            in_specs=[
                pl.BlockSpec((bt, N, C), lambda b, h: (b, 0, 0)),   # x (resident over h)
                pl.BlockSpec((1, C, D), lambda b, h: (h, 0, 0)),    # wq[h]
                pl.BlockSpec((1, C, D), lambda b, h: (h, 0, 0)),    # wk[h]
                pl.BlockSpec((1, C, D), lambda b, h: (h, 0, 0)),    # wv[h]
                pl.BlockSpec((1, D, C), lambda b, h: (h, 0, 0)),    # wproj[h]
                pl.BlockSpec((1, C), lambda b, h: (0, 0)),          # bias (constant)
            ],
            out_specs=pl.BlockSpec((bt, N, C), lambda b, h: (b, 0, 0)),
            scratch_shapes=[pltpu.VMEM((bt * N, C), jnp.float32)],  # f32 accumulator
        ),
        compiler_params=pltpu.CompilerParams(
            dimension_semantics=("parallel", "arbitrary")),
    )(x, wq, wk, wv, wp, bp)


def attention_reference(x, w_qkv, w_proj, b_proj, num_heads):
    """Pure-JAX reference mirroring the PyTorch forward."""
    B, N, C = x.shape
    D = C // num_heads
    scale = D ** (-0.5)
    qkv = x @ w_qkv                                            # (B, N, 3C)
    qkv = qkv.reshape(B, N, 3, num_heads, D).transpose(2, 0, 3, 1, 4)
    q, k, v = qkv[0], qkv[1], qkv[2]                           # (B, H, N, D)
    attn = jnp.einsum("bhnd,bhmd->bhnm", q, k) * scale
    attn = jax.nn.softmax(attn, axis=-1)
    out = jnp.einsum("bhnm,bhmd->bhnd", attn, v)               # (B, H, N, D)
    out = out.transpose(0, 2, 1, 3).reshape(B, N, C)
    return out @ w_proj + b_proj


if __name__ == "__main__":
    # Small shapes consistent with the module: dim=C=32, num_heads=8 -> head_dim=4
    B, N, C = 2, 8, 32
    num_heads = 8

    key = jax.random.PRNGKey(0)
    kx, kq, kp, kb = jax.random.split(key, 4)
    x = jax.random.normal(kx, (B, N, C), dtype=jnp.float32)
    # nn.Linear(dim, dim*3, bias=False): weight (3C, C); stored transposed (C, 3C)
    w_qkv = jax.random.normal(kq, (C, 3 * C), dtype=jnp.float32) * 0.05
    # nn.Linear(dim, dim): weight (C, C) + bias (C,); weight stored transposed
    w_proj = jax.random.normal(kp, (C, C), dtype=jnp.float32) * 0.05
    b_proj = jax.random.normal(kb, (C,), dtype=jnp.float32) * 0.01

    out = attention_forward(x, w_qkv, w_proj, b_proj, num_heads)
    out = jax.block_until_ready(out)

    ref = attention_reference(x, w_qkv, w_proj, b_proj, num_heads)
    assert out.shape == (B, N, C)
    # approx reciprocal in softmax -> slightly looser tolerance than pure f32
    assert jnp.allclose(out, ref, atol=2e-3, rtol=2e-3), "mismatch vs reference"

    print("KERNEL_OK")
</pallas_src>

<mosaic_0001>
module attributes {stable_mosaic.version = 11 : i64} {
  func.func @_attention_kernel(%arg0: i32, %arg1: i32, %arg2: memref<1x8x32xf32, #tpu.memory_space<vmem>>, %arg3: memref<1x32x4xf32, #tpu.memory_space<vmem>>, %arg4: memref<1x32x4xf32, #tpu.memory_space<vmem>>, %arg5: memref<1x32x4xf32, #tpu.memory_space<vmem>>, %arg6: memref<1x4x32xf32, #tpu.memory_space<vmem>>, %arg7: memref<1x32xf32, #tpu.memory_space<vmem>>, %arg8: memref<1x8x32xf32, #tpu.memory_space<vmem>>, %arg9: memref<8x32xf32, #tpu.memory_space<vmem>>) attributes {dimension_semantics = [#tpu.dimension_semantics<parallel>, #tpu.dimension_semantics<arbitrary>], iteration_bounds = array<i64: 2, 8>, scalar_prefetch = 0 : i64, scratch_operands = 1 : i64, tpu.core_type = #tpu.core_type<tc>, window_params = [{transform_indices = @transform_0, window_bounds = array<i64: 1, 8, 32>}, {transform_indices = @transform_1, window_bounds = array<i64: 1, 32, 4>}, {transform_indices = @transform_2, window_bounds = array<i64: 1, 32, 4>}, {transform_indices = @transform_3, window_bounds = array<i64: 1, 32, 4>}, {transform_indices = @transform_4, window_bounds = array<i64: 1, 4, 32>}, {pipeline_mode = #tpu.pipeline_mode<synchronous>, transform_indices = @transform_5, window_bounds = array<i64: 1, 32>}, {transform_indices = @transform_6, window_bounds = array<i64: 1, 8, 32>}]} {
    %c0_i32 = arith.constant 0 : i32
    %0 = arith.cmpi eq, %arg1, %c0_i32 : i32
    %1 = arith.extui %0 : i1 to i32
    %c0_i32_0 = arith.constant 0 : i32
    %2 = arith.cmpi ne, %1, %c0_i32_0 : i32
    scf.if %2 {
      %cst_28 = arith.constant 0.000000e+00 : f32
      %41 = vector.broadcast %cst_28 : f32 to vector<8x32xf32>
      %c0_29 = arith.constant 0 : index
      %c0_30 = arith.constant 0 : index
      %42 = vector.load %arg9[%c0_29, %c0_30] : memref<8x32xf32, #tpu.memory_space<vmem>>, vector<8x32xf32>
      tpu.vector_store %arg9[%c0_29, %c0_30], %41 {strides = array<i32>} : memref<8x32xf32, #tpu.memory_space<vmem>>, vector<8x32xf32>,
    } else {
    }
    %c0 = arith.constant 0 : index
    %c0_1 = arith.constant 0 : index
    %c0_2 = arith.constant 0 : index
    %3 = vector.load %arg2[%c0, %c0_1, %c0_2] : memref<1x8x32xf32, #tpu.memory_space<vmem>>, vector<1x8x32xf32>
    %4 = vector.shape_cast %3 : vector<1x8x32xf32> to vector<8x32xf32>
    %c0_3 = arith.constant 0 : index
    %c0_4 = arith.constant 0 : index
    %c0_5 = arith.constant 0 : index
    %5 = vector.load %arg3[%c0_3, %c0_4, %c0_5] : memref<1x32x4xf32, #tpu.memory_space<vmem>>, vector<1x32x4xf32>
    %6 = vector.shape_cast %5 : vector<1x32x4xf32> to vector<32x4xf32>
    %c0_6 = arith.constant 0 : index
    %c0_7 = arith.constant 0 : index
    %c0_8 = arith.constant 0 : index
    %7 = vector.load %arg4[%c0_6, %c0_7, %c0_8] : memref<1x32x4xf32, #tpu.memory_space<vmem>>, vector<1x32x4xf32>
    %8 = vector.shape_cast %7 : vector<1x32x4xf32> to vector<32x4xf32>
    %c0_9 = arith.constant 0 : index
    %c0_10 = arith.constant 0 : index
    %c0_11 = arith.constant 0 : index
    %9 = vector.load %arg5[%c0_9, %c0_10, %c0_11] : memref<1x32x4xf32, #tpu.memory_space<vmem>>, vector<1x32x4xf32>
    %10 = vector.shape_cast %9 : vector<1x32x4xf32> to vector<32x4xf32>
    %c0_12 = arith.constant 0 : index
    %c0_13 = arith.constant 0 : index
    %c0_14 = arith.constant 0 : index
    %11 = vector.load %arg6[%c0_12, %c0_13, %c0_14] : memref<1x4x32xf32, #tpu.memory_space<vmem>>, vector<1x4x32xf32>
    %12 = vector.shape_cast %11 : vector<1x4x32xf32> to vector<4x32xf32>
    %cst = arith.constant dense<0.000000e+00> : vector<8x4xf32>
    %13 = tpu.matmul %4, %6, %cst {dimension_numbers = #tpu.dot_dimension_numbers<[1], [0], [0], [1], [0, 0, 1, 1], [], []>} : vector<8x32xf32>, vector<32x4xf32>, vector<8x4xf32> -> vector<8x4xf32>
    %cst_15 = arith.constant dense<0.000000e+00> : vector<8x4xf32>
    %14 = tpu.matmul %4, %8, %cst_15 {dimension_numbers = #tpu.dot_dimension_numbers<[1], [0], [0], [1], [0, 0, 1, 1], [], []>} : vector<8x32xf32>, vector<32x4xf32>, vector<8x4xf32> -> vector<8x4xf32>
    %cst_16 = arith.constant dense<0.000000e+00> : vector<8x4xf32>
    %15 = tpu.matmul %4, %10, %cst_16 {dimension_numbers = #tpu.dot_dimension_numbers<[1], [0], [0], [1], [0, 0, 1, 1], [], []>} : vector<8x32xf32>, vector<32x4xf32>, vector<8x4xf32> -> vector<8x4xf32>
    %cst_17 = arith.constant 5.000000e-01 : f32
    %16 = vector.broadcast %cst_17 : f32 to vector<8x4xf32>
    %17 = arith.mulf %13, %16 : vector<8x4xf32>
    %18 = vector.shape_cast %17 : vector<8x4xf32> to vector<1x8x4xf32>
    %19 = vector.shape_cast %14 : vector<8x4xf32> to vector<1x8x4xf32>
    %20 = vector.shape_cast %15 : vector<8x4xf32> to vector<1x8x4xf32>
    "tpu.trace_start"() <{level = 10 : i32, message = "bnd,bmd->bnm"}> : () -> ()
    %cst_18 = arith.constant dense<0.000000e+00> : vector<1x8x8xf32>
    %21 = tpu.matmul %18, %19, %cst_18 {dimension_numbers = #tpu.dot_dimension_numbers<[2], [2], [1], [1], [0, 0, 0, 1, 1, 1], [0], [0]>} : vector<1x8x4xf32>, vector<1x8x4xf32>, vector<1x8x8xf32> -> vector<1x8x8xf32>
    "tpu.trace_stop"() : () -> ()
    %cst_19 = arith.constant dense<0xFF800000> : vector<1x8xf32>
    %22 = vector.multi_reduction <maximumf>, %21, %cst_19 [2] : vector<1x8x8xf32> to vector<1x8xf32>
    %23 = vector.shape_cast %22 : vector<1x8xf32> to vector<1x8x1xf32>
    %24 = vector.broadcast %23 : vector<1x8x1xf32> to vector<1x8x8xf32>
    %25 = arith.subf %21, %24 : vector<1x8x8xf32>
    %26 = math.exp %25 : vector<1x8x8xf32>
    %cst_20 = arith.constant dense<0.000000e+00> : vector<1x8xf32>
    %27 = vector.multi_reduction <add>, %26, %cst_20 [2] : vector<1x8x8xf32> to vector<1x8xf32>
    %28 = vector.shape_cast %27 : vector<1x8xf32> to vector<1x8x1xf32>
    %29 = tpu.reciprocal %28 {approx = true} : vector<1x8x1xf32> -> vector<1x8x1xf32>
    %30 = vector.broadcast %29 : vector<1x8x1xf32> to vector<1x8x8xf32>
    %31 = arith.mulf %26, %30 : vector<1x8x8xf32>
    "tpu.trace_start"() <{level = 10 : i32, message = "bnm,bmd->bnd"}> : () -> ()
    %cst_21 = arith.constant dense<0.000000e+00> : vector<1x8x4xf32>
    %32 = tpu.matmul %31, %20, %cst_21 {dimension_numbers = #tpu.dot_dimension_numbers<[2], [1], [1], [2], [0, 0, 0, 1, 1, 2], [0], [0]>} : vector<1x8x8xf32>, vector<1x8x4xf32>, vector<1x8x4xf32> -> vector<1x8x4xf32>
    "tpu.trace_stop"() : () -> ()
    %33 = vector.shape_cast %32 : vector<1x8x4xf32> to vector<8x4xf32>
    %c0_22 = arith.constant 0 : index
    %c0_23 = arith.constant 0 : index
    %34 = vector.load %arg9[%c0_22, %c0_23] : memref<8x32xf32, #tpu.memory_space<vmem>>, vector<8x32xf32>
    %cst_24 = arith.constant dense<0.000000e+00> : vector<8x32xf32>
    %35 = tpu.matmul %33, %12, %cst_24 {dimension_numbers = #tpu.dot_dimension_numbers<[1], [0], [0], [1], [0, 0, 1, 1], [], []>} : vector<8x4xf32>, vector<4x32xf32>, vector<8x32xf32> -> vector<8x32xf32>
    %36 = arith.addf %34, %35 : vector<8x32xf32>
    %c0_25 = arith.constant 0 : index
    %c0_26 = arith.constant 0 : index
    %37 = vector.load %arg9[%c0_25, %c0_26] : memref<8x32xf32, #tpu.memory_space<vmem>>, vector<8x32xf32>
    tpu.vector_store %arg9[%c0_25, %c0_26], %36 {strides = array<i32>} : memref<8x32xf32, #tpu.memory_space<vmem>>, vector<8x32xf32>,
    %c7_i32 = arith.constant 7 : i32
    %38 = arith.cmpi eq, %arg1, %c7_i32 : i32
    %39 = arith.extui %38 : i1 to i32
    %c0_i32_27 = arith.constant 0 : i32
    %40 = arith.cmpi ne, %39, %c0_i32_27 : i32
    scf.if %40 {
      %c0_28 = arith.constant 0 : index
      %c0_29 = arith.constant 0 : index
      %41 = vector.load %arg9[%c0_28, %c0_29] : memref<8x32xf32, #tpu.memory_space<vmem>>, vector<8x32xf32>
      %c0_30 = arith.constant 0 : index
      %c0_31 = arith.constant 0 : index
      %42 = vector.load %arg7[%c0_30, %c0_31] : memref<1x32xf32, #tpu.memory_space<vmem>>, vector<1x32xf32>
      %43 = vector.broadcast %42 : vector<1x32xf32> to vector<8x32xf32>
      %44 = arith.addf %41, %43 : vector<8x32xf32>
      %45 = vector.shape_cast %44 : vector<8x32xf32> to vector<1x8x32xf32>
      %c0_32 = arith.constant 0 : index
      %c0_33 = arith.constant 0 : index
      %c0_34 = arith.constant 0 : index
      %46 = vector.load %arg8[%c0_32, %c0_33, %c0_34] : memref<1x8x32xf32, #tpu.memory_space<vmem>>, vector<1x8x32xf32>
      tpu.vector_store %arg8[%c0_32, %c0_33, %c0_34], %45 {strides = array<i32>} : memref<1x8x32xf32, #tpu.memory_space<vmem>>, vector<1x8x32xf32>,
    } else {
    }
    return
  }
  func.func @transform_0(%arg0: i32, %arg1: i32) -> (i32, i32, i32) {
    %c0_i32 = arith.constant 0 : i32
    %c0_i32_0 = arith.constant 0 : i32
    %c0_i32_1 = arith.constant 0 : i32
    return %arg0, %c0_i32, %c0_i32_0 : i32, i32, i32
  }
  func.func @transform_1(%arg0: i32, %arg1: i32) -> (i32, i32, i32) {
    %c0_i32 = arith.constant 0 : i32
    %c0_i32_0 = arith.constant 0 : i32
    %c0_i32_1 = arith.constant 0 : i32
    return %arg1, %c0_i32, %c0_i32_0 : i32, i32, i32
  }
  func.func @transform_2(%arg0: i32, %arg1: i32) -> (i32, i32, i32) {
    %c0_i32 = arith.constant 0 : i32
    %c0_i32_0 = arith.constant 0 : i32
    %c0_i32_1 = arith.constant 0 : i32
    return %arg1, %c0_i32, %c0_i32_0 : i32, i32, i32
  }
  func.func @transform_3(%arg0: i32, %arg1: i32) -> (i32, i32, i32) {
    %c0_i32 = arith.constant 0 : i32
    %c0_i32_0 = arith.constant 0 : i32
    %c0_i32_1 = arith.constant 0 : i32
    return %arg1, %c0_i32, %c0_i32_0 : i32, i32, i32
  }
  func.func @transform_4(%arg0: i32, %arg1: i32) -> (i32, i32, i32) {
    %c0_i32 = arith.constant 0 : i32
    %c0_i32_0 = arith.constant 0 : i32
    %c0_i32_1 = arith.constant 0 : i32
    return %arg1, %c0_i32, %c0_i32_0 : i32, i32, i32
  }
  func.func @transform_5(%arg0: i32, %arg1: i32) -> (i32, i32) {
    %c0_i32 = arith.constant 0 : i32
    %c0_i32_0 = arith.constant 0 : i32
    %c0_i32_1 = arith.constant 0 : i32
    return %c0_i32, %c0_i32_0 : i32, i32
  }
  func.func @transform_6(%arg0: i32, %arg1: i32) -> (i32, i32, i32) {
    %c0_i32 = arith.constant 0 : i32
    %c0_i32_0 = arith.constant 0 : i32
    %c0_i32_1 = arith.constant 0 : i32
    return %arg0, %c0_i32, %c0_i32_0 : i32, i32, i32
  }
}

</mosaic_0001>

<llo_original>
// kernel: tpu_custom_call.1
$region0: #{tpu_custom_call.1}
  #allocation0 [shape = 'u32[]', space=smem, size = 0x4, offset = 0x4, fixed_abs, tag = 'smem constant byte address 0x4 - core index']
  #allocation1 [shape = 'u32[144,128]{1,0:T(1,128)}', space=vmem, size = 0x12000, scoped, tag = 'internal scratch']
  #allocation2 [shape = 'f32[8,32]{1,0:T(8,128)}', space=vmem, size = 0x1000, scoped, tag = 'scratch operand']
  %s0 = inlined_call_operand.vmem [shape: f32[2,8,32], index: 0, kind: input, shape index: {}]
  %s1 = inlined_call_operand.vmem [shape: f32[8,32,4], index: 1, kind: input, shape index: {}]
  %s2 = inlined_call_operand.vmem [shape: f32[8,32,4], index: 2, kind: input, shape index: {}]
  %s3 = inlined_call_operand.vmem [shape: f32[8,32,4], index: 3, kind: input, shape index: {}]
  %s4 = inlined_call_operand.vmem [shape: f32[8,4,32], index: 4, kind: input, shape index: {}]
  %s5 = inlined_call_operand.vmem [shape: f32[1,32], index: 5, kind: input, shape index: {}]
  %s6 = inlined_call_operand.hbm [shape: f32[2,8,32], index: 6, kind: output, shape index: {}]
  %s7 = sld [smem:[#allocation0]]
  $region65: #{tpu_custom_call.1} parent=0
    _
  %s9 = ssub.s32 1, %s7
  %s10 = scalar_select 0, %s9, %s7
  $region1: #{tpu_custom_call.1} parent=0
    #allocation3 [shape = 'u8[8192]{0}', space=vmem, size = 0x2000, scoped, tag = 'output window, operand 0']
    #allocation4 [shape = 's32[2]{0}', space=sflag, size = 0x8, scoped, tag = 'scoped memory for tpu_custom_call.1']
    %11 = vsyncpa [#allocation4], 0
    %s12 = scalar_lea.sflag [#allocation4], 1
    %13 = vsyncpa %s12, 0
    loop: start=0, step=1, limit=18
    $region2: #{tpu_custom_call.1} parent=1 // loop_pre_header
      _
    $region3: #{tpu_custom_call.1} parent=1 // loop_header
      %s15 = sphi 0, %s19
      %p16 = scmp.ge.s32.totalorder %s15, 18
      %s22 = sphi 0, %s34
      %s23 = sphi 0, %s30
      %s24 = sphi 0, %s22
      %s25 = sphi 0, %s23
      %s26 = sphi 0, %s24
      %s27 = sphi 0, %s25
      %s37 = sphi 0, %s39
      %s40 = sphi 0, %s37
      %s41 = sphi 0, %s40
      %s57 = sphi 0, %s41
      %s63 = sphi 0, %s65
      %s66 = sphi 0, %s63
      %s67 = sphi 0, %s66
      %s83 = sphi 0, %s67
      %s89 = sphi 0, %s91
      %s92 = sphi 0, %s89
      %s93 = sphi 0, %s92
      %s109 = sphi 0, %s93
      %s115 = sphi 0, %s117
      %s118 = sphi 0, %s115
      %s119 = sphi 0, %s118
      %s135 = sphi 0, %s119
      %s141 = sphi 0, %s143
      %s144 = sphi 0, %s141
      %s145 = sphi 0, %s144
      %s161 = sphi 0, %s145
      %s165 = sphi 0, %s165
      %s167 = sphi 0, %s165
      %s168 = sphi 0, %s167
      %s182 = sphi 0, %s168
      %s188 = sphi 0, %s190
      %s191 = sphi 0, %s188
      %s192 = sphi 0, %s191
      %s208 = sphi 0, %s192
    $region4: #{tpu_custom_call.1} parent=1 // loop_header_branch
      %18 = sbr.rel (%p16) target = $region8
    $region5: #{tpu_custom_call.1} parent=1 // loop_body
      %s20 = ssub.s32 %s15, 1
      %s21 = ssub.s32 %s15, 2
      %s28 = sadd.s32 1, %s23
      %p29 = scmp.ge.s32.totalorder %s28, 8
      %s30 = scalar_select %p29, 0, %s28
      %s31 = sadd.s32 1, %s22
      %s32 = scalar_select %p29, %s31, %s22
      %p33 = scmp.ge.s32.totalorder %s32, 2
      %s34 = scalar_select %p33, 0, %s32
      %s35 = ssub.s32 %s22, %s34
      %p36 = scmp.eq.s32.totalorder %s35, 0
      %s38 = sadd.s32 %s37, 1
      %s39 = scalar_select %p36, %s37, %s38
      %p42 = pneg %p36
      %p43 = scmp.eq.s32.totalorder %s15, 15
      %p44 = por %p42, %p43
      %p45 = scmp.ne.s32.totalorder %s37, %s40
      %p46 = scmp.eq.s32.totalorder %s15, 0
      %p47 = por %p45, %p46
      %p48 = scmp.ne.s32.totalorder %s37, %s40
      %p49 = scmp.eq.s32.totalorder %s20, 15
      %p50 = por %p48, %p49
      %p51 = scmp.ne.s32.totalorder %s40, %s41
      %p52 = scmp.eq.s32.totalorder %s20, 0
      %p53 = por %p51, %p52
      %p54 = scmp.ne.s32.totalorder %s40, %s41
      %p55 = scmp.eq.s32.totalorder %s21, 15
      %p56 = por %p54, %p55
      %p58 = scmp.ne.s32.totalorder %s41, %s57
      %p59 = scmp.eq.s32.totalorder %s21, 0
      %p60 = por %p58, %p59
      %s61 = ssub.s32 %s23, %s30
      %p62 = scmp.eq.s32.totalorder %s61, 0
      %s64 = sadd.s32 %s63, 1
      %s65 = scalar_select %p62, %s63, %s64
      %p68 = pneg %p62
      %p69 = scmp.eq.s32.totalorder %s15, 15
      %p70 = por %p68, %p69
      %p71 = scmp.ne.s32.totalorder %s63, %s66
      %p72 = scmp.eq.s32.totalorder %s15, 0
      %p73 = por %p71, %p72
      %p74 = scmp.ne.s32.totalorder %s63, %s66
      %p75 = scmp.eq.s32.totalorder %s20, 15
      %p76 = por %p74, %p75
      %p77 = scmp.ne.s32.totalorder %s66, %s67
      %p78 = scmp.eq.s32.totalorder %s20, 0
      %p79 = por %p77, %p78
      %p80 = scmp.ne.s32.totalorder %s66, %s67
      %p81 = scmp.eq.s32.totalorder %s21, 15
      %p82 = por %p80, %p81
      %p84 = scmp.ne.s32.totalorder %s67, %s83
      %p85 = scmp.eq.s32.totalorder %s21, 0
      %p86 = por %p84, %p85
      %s87 = ssub.s32 %s23, %s30
      %p88 = scmp.eq.s32.totalorder %s87, 0
      %s90 = sadd.s32 %s89, 1
      %s91 = scalar_select %p88, %s89, %s90
      %p94 = pneg %p88
      %p95 = scmp.eq.s32.totalorder %s15, 15
      %p96 = por %p94, %p95
      %p97 = scmp.ne.s32.totalorder %s89, %s92
      %p98 = scmp.eq.s32.totalorder %s15, 0
      %p99 = por %p97, %p98
      %p100 = scmp.ne.s32.totalorder %s89, %s92
      %p101 = scmp.eq.s32.totalorder %s20, 15
      %p102 = por %p100, %p101
      %p103 = scmp.ne.s32.totalorder %s92, %s93
      %p104 = scmp.eq.s32.totalorder %s20, 0
      %p105 = por %p103, %p104
      %p106 = scmp.ne.s32.totalorder %s92, %s93
      %p107 = scmp.eq.s32.totalorder %s21, 15
      %p108 = por %p106, %p107
      %p110 = scmp.ne.s32.totalorder %s93, %s109
      %p111 = scmp.eq.s32.totalorder %s21, 0
      %p112 = por %p110, %p111
      %s113 = ssub.s32 %s23, %s30
      %p114 = scmp.eq.s32.totalorder %s113, 0
      %s116 = sadd.s32 %s115, 1
      %s117 = scalar_select %p114, %s115, %s116
      %p120 = pneg %p114
      %p121 = scmp.eq.s32.totalorder %s15, 15
      %p122 = por %p120, %p121
      %p123 = scmp.ne.s32.totalorder %s115, %s118
      %p124 = scmp.eq.s32.totalorder %s15, 0
      %p125 = por %p123, %p124
      %p126 = scmp.ne.s32.totalorder %s115, %s118
      %p127 = scmp.eq.s32.totalorder %s20, 15
      %p128 = por %p126, %p127
      %p129 = scmp.ne.s32.totalorder %s118, %s119
      %p130 = scmp.eq.s32.totalorder %s20, 0
      %p131 = por %p129, %p130
      %p132 = scmp.ne.s32.totalorder %s118, %s119
      %p133 = scmp.eq.s32.totalorder %s21, 15
      %p134 = por %p132, %p133
      %p136 = scmp.ne.s32.totalorder %s119, %s135
      %p137 = scmp.eq.s32.totalorder %s21, 0
      %p138 = por %p136, %p137
      %s139 = ssub.s32 %s23, %s30
      %p140 = scmp.eq.s32.totalorder %s139, 0
      %s142 = sadd.s32 %s141, 1
      %s143 = scalar_select %p140, %s141, %s142
      %p146 = pneg %p140
      %p147 = scmp.eq.s32.totalorder %s15, 15
      %p148 = por %p146, %p147
      %p149 = scmp.ne.s32.totalorder %s141, %s144
      %p150 = scmp.eq.s32.totalorder %s15, 0
      %p151 = por %p149, %p150
      %p152 = scmp.ne.s32.totalorder %s141, %s144
      %p153 = scmp.eq.s32.totalorder %s20, 15
      %p154 = por %p152, %p153
      %p155 = scmp.ne.s32.totalorder %s144, %s145
      %p156 = scmp.eq.s32.totalorder %s20, 0
      %p157 = por %p155, %p156
      %p158 = scmp.ne.s32.totalorder %s144, %s145
      %p159 = scmp.eq.s32.totalorder %s21, 15
      %p160 = por %p158, %p159
      %p162 = scmp.ne.s32.totalorder %s145, %s161
      %p163 = scmp.eq.s32.totalorder %s21, 0
      %p164 = por %p162, %p163
      %s166 = sadd.s32 %s165, 1
      %p169 = scmp.eq.s32.totalorder %s15, 15
      %p170 = scmp.ne.s32.totalorder %s165, %s167
      %p171 = scmp.eq.s32.totalorder %s15, 0
      %p172 = por %p170, %p171
      %p173 = scmp.ne.s32.totalorder %s165, %s167
      %p174 = scmp.eq.s32.totalorder %s20, 15
      %p175 = por %p173, %p174
      %p176 = scmp.ne.s32.totalorder %s167, %s168
      %p177 = scmp.eq.s32.totalorder %s20, 0
      %p178 = por %p176, %p177
      %p179 = scmp.ne.s32.totalorder %s167, %s168
      %p180 = scmp.eq.s32.totalorder %s21, 15
      %p181 = por %p179, %p180
      %p183 = scmp.ne.s32.totalorder %s168, %s182
      %p184 = scmp.eq.s32.totalorder %s21, 0
      %p185 = por %p183, %p184
      %s186 = ssub.s32 %s22, %s34
      %p187 = scmp.eq.s32.totalorder %s186, 0
      %s189 = sadd.s32 %s188, 1
      %s190 = scalar_select %p187, %s188, %s189
      %p193 = pneg %p187
      %p194 = scmp.eq.s32.totalorder %s15, 15
      %p195 = por %p193, %p194
      %p196 = scmp.ne.s32.totalorder %s188, %s191
      %p197 = scmp.eq.s32.totalorder %s15, 0
      %p198 = por %p196, %p197
      %p199 = scmp.ne.s32.totalorder %s188, %s191
      %p200 = scmp.eq.s32.totalorder %s20, 15
      %p201 = por %p199, %p200
      %p202 = scmp.ne.s32.totalorder %s191, %s192
      %p203 = scmp.eq.s32.totalorder %s20, 0
      %p204 = por %p202, %p203
      %p205 = scmp.ne.s32.totalorder %s191, %s192
      %p206 = scmp.eq.s32.totalorder %s21, 15
      %p207 = por %p205, %p206
      %p209 = scmp.ne.s32.totalorder %s192, %s208
      %p210 = scmp.eq.s32.totalorder %s21, 0
      %p211 = por %p209, %p210
      %p212 = scmp.le.s32.totalorder 1, %s15
      %p213 = scmp.lt.s32.totalorder %s15, 17
      %p214 = pnand %p212, %p213
      %p215 = pneg %p214
      // Predicated region
      $region9: #{tpu_custom_call.1} parent=5 // pred_check
        _
      $region10: #{tpu_custom_call.1} parent=5 // pred_check_branch
        %217 = sbr.rel (%p214) target = $region12
      $region11: #{tpu_custom_call.1} parent=5 // pred_region
        %s218 = ssub.s32 %s15, 1
        // Predicated region
        $region13: #{tpu_custom_call.1} parent=11 // pred_check
          %p219 = pneg %p178
        $region14: #{tpu_custom_call.1} parent=11 // pred_check_branch
          %221 = sbr.rel (%p219) target = $region16
        $region15: #{tpu_custom_call.1} parent=11 // pred_region
          _
        $region16: #{tpu_custom_call.1} parent=11 // pred_fallthru
          _
      $region12: #{tpu_custom_call.1} parent=5 // pred_fallthru
        _
      %p222 = scmp.lt.s32.totalorder %s15, 16
      // Predicated region
      $region17: #{tpu_custom_call.1} parent=5 // pred_check
        %p223 = pneg %p222
      $region18: #{tpu_custom_call.1} parent=5 // pred_check_branch
        %225 = sbr.rel (%p223) target = $region20
      $region19: #{tpu_custom_call.1} parent=5 // pred_region
        // Predicated region
        $region21: #{tpu_custom_call.1} parent=19 // pred_check
          %p226 = pneg %p47
        $region22: #{tpu_custom_call.1} parent=19 // pred_check_branch
          %228 = sbr.rel (%p226) target = $region24
        $region23: #{tpu_custom_call.1} parent=19 // pred_region
          %p229 = scmp.lt.s32.totalorder %s22, 1
          %s230 = scalar_select %p229, %s22, 1
          %s231 = smul.addr %s230, 8
          %s232 = scalar_lea.vmem %s0, %s231
        $region24: #{tpu_custom_call.1} parent=19 // pred_fallthru
          _
        // Predicated region
        $region25: #{tpu_custom_call.1} parent=19 // pred_check
          %p233 = pneg %p73
        $region26: #{tpu_custom_call.1} parent=19 // pred_check_branch
          %235 = sbr.rel (%p233) target = $region28
        $region27: #{tpu_custom_call.1} parent=19 // pred_region
          %p236 = scmp.lt.s32.totalorder %s23, 7
          %s237 = scalar_select %p236, %s23, 7
          %s238 = smul.addr %s237, 4
          %s239 = smul.addr %s238, 8
          %s240 = scalar_lea.vmem %s1, %s239
        $region28: #{tpu_custom_call.1} parent=19 // pred_fallthru
          _
        // Predicated region
        $region29: #{tpu_custom_call.1} parent=19 // pred_check
          %p241 = pneg %p99
        $region30: #{tpu_custom_call.1} parent=19 // pred_check_branch
          %243 = sbr.rel (%p241) target = $region32
        $region31: #{tpu_custom_call.1} parent=19 // pred_region
          %p244 = scmp.lt.s32.totalorder %s23, 7
          %s245 = scalar_select %p244, %s23, 7
          %s246 = smul.addr %s245, 4
          %s247 = smul.addr %s246, 8
          %s248 = scalar_lea.vmem %s2, %s247
        $region32: #{tpu_custom_call.1} parent=19 // pred_fallthru
          _
        // Predicated region
        $region33: #{tpu_custom_call.1} parent=19 // pred_check
          %p249 = pneg %p125
        $region34: #{tpu_custom_call.1} parent=19 // pred_check_branch
          %251 = sbr.rel (%p249) target = $region36
        $region35: #{tpu_custom_call.1} parent=19 // pred_region
          %p252 = scmp.lt.s32.totalorder %s23, 7
          %s253 = scalar_select %p252, %s23, 7
          %s254 = smul.addr %s253, 4
          %s255 = smul.addr %s254, 8
          %s256 = scalar_lea.vmem %s3, %s255
        $region36: #{tpu_custom_call.1} parent=19 // pred_fallthru
          _
        // Predicated region
        $region37: #{tpu_custom_call.1} parent=19 // pred_check
          %p257 = pneg %p151
        $region38: #{tpu_custom_call.1} parent=19 // pred_check_branch
          %259 = sbr.rel (%p257) target = $region40
        $region39: #{tpu_custom_call.1} parent=19 // pred_region
          %p260 = scmp.lt.s32.totalorder %s23, 7
          %s261 = scalar_select %p260, %s23, 7
          %s262 = smul.addr %s261, 4
          %s263 = scalar_lea.vmem %s4, %s262
        $region40: #{tpu_custom_call.1} parent=19 // pred_fallthru
          _
      $region20: #{tpu_custom_call.1} parent=5 // pred_fallthru
        _
      %p264 = scmp.le.s32.totalorder 1, %s15
      %p265 = scmp.lt.s32.totalorder %s15, 17
      %p266 = pnand %p264, %p265
      %p267 = pneg %p266
      // Predicated region
      $region41: #{tpu_custom_call.1} parent=5 // pred_check
        _
      $region42: #{tpu_custom_call.1} parent=5 // pred_check_branch
        %269 = sbr.rel (%p266) target = $region44
      $region43: #{tpu_custom_call.1} parent=5 // pred_region
        %s270 = ssub.s32 %s15, 1
        %p271 = scmp.lt.s32.totalorder %s24, 1
        %s272 = scalar_select %p271, %s24, 1
        %s273 = smul.addr %s272, 8
        %s274 = scalar_lea.vmem %s0, %s273
        %p275 = pneg %p53
        %p276 = pneg %p50
        %p277 = scmp.lt.s32.totalorder %s25, 7
        %s278 = scalar_select %p277, %s25, 7
        %s279 = smul.addr %s278, 4
        %s280 = smul.addr %s279, 8
        %s281 = scalar_lea.vmem %s1, %s280
        %p282 = pneg %p79
        %p283 = pneg %p76
        %p284 = scmp.lt.s32.totalorder %s25, 7
        %s285 = scalar_select %p284, %s25, 7
        %s286 = smul.addr %s285, 4
        %s287 = smul.addr %s286, 8
        %s288 = scalar_lea.vmem %s2, %s287
        %p289 = pneg %p105
        %p290 = pneg %p102
        %p291 = scmp.lt.s32.totalorder %s25, 7
        %s292 = scalar_select %p291, %s25, 7
        %s293 = smul.addr %s292, 4
        %s294 = smul.addr %s293, 8
        %s295 = scalar_lea.vmem %s3, %s294
        %p296 = pneg %p131
        %p297 = pneg %p128
        %p298 = scmp.lt.s32.totalorder %s25, 7
        %s299 = scalar_select %p298, %s25, 7
        %s300 = smul.addr %s299, 4
        %s301 = scalar_lea.vmem %s4, %s300
        %p302 = pneg %p157
        %p303 = pneg %p154
        %p304 = pneg %p178
        %p305 = pneg %p175
        %p306 = pneg %p204
        %p307 = pneg %p201
        %s308 = sand.u32 %s191, 1
        %s309 = scalar_lea.sflag [#allocation4], %s308
        %s310 = sand.u32 %s191, 1
        %s311 = smul.addr %s310, 8
        %s312 = scalar_lea.vmem [#allocation3], %s311
        %p313 = scmp.lt.s32.totalorder %s24, 1
        %s314 = scalar_select %p313, %s24, 1
        %s315 = smul.addr %s314, 8
        %s316 = scalar_lea.vmem %s0, %s315
        %p317 = scmp.lt.s32.totalorder %s25, 7
        %s318 = scalar_select %p317, %s25, 7
        %s319 = smul.addr %s318, 4
        %s320 = smul.addr %s319, 8
        %s321 = scalar_lea.vmem %s1, %s320
        %p322 = scmp.lt.s32.totalorder %s25, 7
        %s323 = scalar_select %p322, %s25, 7
        %s324 = smul.addr %s323, 4
        %s325 = smul.addr %s324, 8
        %s326 = scalar_lea.vmem %s2, %s325
        %p327 = scmp.lt.s32.totalorder %s25, 7
        %s328 = scalar_select %p327, %s25, 7
        %s329 = smul.addr %s328, 4
        %s330 = smul.addr %s329, 8
        %s331 = scalar_lea.vmem %s3, %s330
        %p332 = scmp.lt.s32.totalorder %s25, 7
        %s333 = scalar_select %p332, %s25, 7
        %s334 = smul.addr %s333, 4
        %s335 = scalar_lea.vmem %s4, %s334
        %p336 = scmp.eq.s32.totalorder %s25, 0
        // Predicated region
        $region45: #{tpu_custom_call.1} parent=43 // pred_check
          %p337 = pneg %p336
        $region46: #{tpu_custom_call.1} parent=43 // pred_check_branch
          %339 = sbr.rel (%p337) target = $region48
        $region47: #{tpu_custom_call.1} parent=43 // pred_region
          %vm340 = vcmask 261120
          %341 = vst.msk [vmem:[#allocation2] sm:$0xff] %vm340, 0.0
        $region48: #{tpu_custom_call.1} parent=43 // pred_fallthru
          _
        %v342 = vld [vmem:[%s316] sm:$0xff]
        %v343 = vld [vmem:[%s321] sm:$0xff]
        %v344 = vld [vmem:[%s321 + $0x8] sm:$0xff]
        %v345 = vld [vmem:[%s321 + $0x10] sm:$0xff]
        %v346 = vld [vmem:[%s321 + $0x18] sm:$0xff]
        %v347 = vld [vmem:[%s326] sm:$0xff]
        %v348 = vld [vmem:[%s326 + $0x8] sm:$0xff]
        %v349 = vld [vmem:[%s326 + $0x10] sm:$0xff]
        %v350 = vld [vmem:[%s326 + $0x18] sm:$0xff]
        %v351 = vld [vmem:[%s331] sm:$0xff]
        %v352 = vld [vmem:[%s331 + $0x8] sm:$0xff]
        %v353 = vld [vmem:[%s331 + $0x10] sm:$0xff]
        %v354 = vld [vmem:[%s331 + $0x18] sm:$0xff]
        %v355 = vld [vmem:[%s335] sm:$0xf]
        %vm356 = vcmask 261120
        %v358 = vsel %vm356, %v342, 0
        %360 = vmatprep.subr.mxu0 0.0
        %361 = vmatpush1.msra.mxu0 %v343
        %362 = vmatprep.subr.mxu0 0.0
        %363 = vmatpush1.msra.mxu0 %v344
        %364 = vmatprep.subr.mxu0 0.0
        %365 = vmatpush1.msra.mxu0 %v345
        %366 = vmatprep.subr.mxu0 0.0
        %367 = vmatpush1.msra.mxu0 %v346
        %368 = vmatprep.subr.mxu0 0.0
        %369 = vmatpush1.msra.mxu0 0.0
        %370 = vmatprep.subr.mxu0 0.0
        %371 = vmatpush1.msra.mxu0 0.0
        %372 = vmatprep.subr.mxu0 0.0
        %373 = vmatpush1.msra.mxu0 0.0
        %374 = vmatprep.subr.mxu0 0.0
        %375 = vmatpush1.msra.mxu0 0.0
        %376 = vmatprep.subr.mxu0 0.0
        %377 = vmatpush1.msra.mxu0 0.0
        %378 = vmatprep.subr.mxu0 0.0
        %379 = vmatpush1.msra.mxu0 0.0
        %380 = vmatprep.subr.mxu0 0.0
        %381 = vmatpush1.msra.mxu0 0.0
        %382 = vmatprep.subr.mxu0 0.0
        %383 = vmatpush1.msra.mxu0 0.0
        %384 = vmatprep.subr.mxu0 0.0
        %385 = vmatpush1.msra.mxu0 0.0
        %386 = vmatprep.subr.mxu0 0.0
        %387 = vmatpush1.msra.mxu0 0.0
        %388 = vmatprep.subr.mxu0 0.0
        %389 = vmatpush1.msra.mxu0 0.0
        %390 = vmatprep.subr.mxu0 0.0
        %391 = vmatpush1.msra.mxu0 0.0
        %392 = vmatprep.subr.mxu0 0.0
        %393 = vmatpush1.msra.mxu0 0.0
        %394 = vmatprep.subr.mxu0 0.0
        %395 = vmatpush1.msra.mxu0 0.0
        %396 = vmatprep.subr.mxu0 0.0
        %397 = vmatpush1.msra.mxu0 0.0
        %398 = vmatprep.subr.mxu0 0.0
        %399 = vmatpush1.msra.mxu0 0.0
        %400 = vmatprep.subr.mxu0 0.0
        %401 = vmatpush1.msra.mxu0 0.0
        %402 = vmatprep.subr.mxu0 0.0
        %403 = vmatpush1.msra.mxu0 0.0
        %404 = vmatprep.subr.mxu0 0.0
        %405 = vmatpush1.msra.mxu0 0.0
        %406 = vmatprep.subr.mxu0 0.0
        %407 = vmatpush1.msra.mxu0 0.0
        %408 = vmatprep.subr.mxu0 0.0
        %409 = vmatpush1.msra.mxu0 0.0
        %410 = vmatprep.subr.mxu0 0.0
        %411 = vmatpush1.msra.mxu0 0.0
        %412 = vmatprep.subr.mxu0 0.0
        %413 = vmatpush1.msra.mxu0 0.0
        %414 = vmatprep.subr.mxu0 0.0
        %415 = vmatpush1.msra.mxu0 0.0
        %416 = vmatprep.subr.mxu0 0.0
        %417 = vmatpush1.msra.mxu0 0.0
        %418 = vmatprep.subr.mxu0 0.0
        %419 = vmatpush1.msra.mxu0 0.0
        %420 = vmatprep.subr.mxu0 0.0
        %421 = vmatpush1.msra.mxu0 0.0
        %422 = vmatprep.subr.mxu0 0.0
        %423 = vmatpush1.msra.mxu0 0.0
        %424 = vmatprep.mubr.f32.mxu0 0.0
        %425 = vmatmul.mubr.f32.gmra.mrb[0].mxu0 %v358
        %v426 = vpop.f32.mrb[0].mxu0
        %v427 = vadd.f32 0.0, %v426
        %v428 = vpop.f32.mrb[0].mxu0
        %429 = vdwg.mxu0
        %430 = vmatprep.subr.mxu0 0.0
        %431 = vmatpush1.msra.mxu0 %v347
        %432 = vmatprep.subr.mxu0 0.0
        %433 = vmatpush1.msra.mxu0 %v348
        %434 = vmatprep.subr.mxu0 0.0
        %435 = vmatpush1.msra.mxu0 %v349
        %436 = vmatprep.subr.mxu0 0.0
        %437 = vmatpush1.msra.mxu0 %v350
        %438 = vmatprep.subr.mxu0 0.0
        %439 = vmatpush1.msra.mxu0 0.0
        %440 = vmatprep.subr.mxu0 0.0
        %441 = vmatpush1.msra.mxu0 0.0
        %442 = vmatprep.subr.mxu0 0.0
        %443 = vmatpush1.msra.mxu0 0.0
        %444 = vmatprep.subr.mxu0 0.0
        %445 = vmatpush1.msra.mxu0 0.0
        %446 = vmatprep.subr.mxu0 0.0
        %447 = vmatpush1.msra.mxu0 0.0
        %448 = vmatprep.subr.mxu0 0.0
        %449 = vmatpush1.msra.mxu0 0.0
        %450 = vmatprep.subr.mxu0 0.0
        %451 = vmatpush1.msra.mxu0 0.0
        %452 = vmatprep.subr.mxu0 0.0
        %453 = vmatpush1.msra.mxu0 0.0
        %454 = vmatprep.subr.mxu0 0.0
        %455 = vmatpush1.msra.mxu0 0.0
        %456 = vmatprep.subr.mxu0 0.0
        %457 = vmatpush1.msra.mxu0 0.0
        %458 = vmatprep.subr.mxu0 0.0
        %459 = vmatpush1.msra.mxu0 0.0
        %460 = vmatprep.subr.mxu0 0.0
        %461 = vmatpush1.msra.mxu0 0.0
        %462 = vmatprep.subr.mxu0 0.0
        %463 = vmatpush1.msra.mxu0 0.0
        %464 = vmatprep.subr.mxu0 0.0
        %465 = vmatpush1.msra.mxu0 0.0
        %466 = vmatprep.subr.mxu0 0.0
        %467 = vmatpush1.msra.mxu0 0.0
        %468 = vmatprep.subr.mxu0 0.0
        %469 = vmatpush1.msra.mxu0 0.0
        %470 = vmatprep.subr.mxu0 0.0
        %471 = vmatpush1.msra.mxu0 0.0
        %472 = vmatprep.subr.mxu0 0.0
        %473 = vmatpush1.msra.mxu0 0.0
        %474 = vmatprep.subr.mxu0 0.0
        %475 = vmatpush1.msra.mxu0 0.0
        %476 = vmatprep.subr.mxu0 0.0
        %477 = vmatpush1.msra.mxu0 0.0
        %478 = vmatprep.subr.mxu0 0.0
        %479 = vmatpush1.msra.mxu0 0.0
        %480 = vmatprep.subr.mxu0 0.0
        %481 = vmatpush1.msra.mxu0 0.0
        %482 = vmatprep.subr.mxu0 0.0
        %483 = vmatpush1.msra.mxu0 0.0
        %484 = vmatprep.subr.mxu0 0.0
        %485 = vmatpush1.msra.mxu0 0.0
        %486 = vmatprep.subr.mxu0 0.0
        %487 = vmatpush1.msra.mxu0 0.0
        %488 = vmatprep.subr.mxu0 0.0
        %489 = vmatpush1.msra.mxu0 0.0
        %490 = vmatprep.subr.mxu0 0.0
        %491 = vmatpush1.msra.mxu0 0.0
        %492 = vmatprep.subr.mxu0 0.0
        %493 = vmatpush1.msra.mxu0 0.0
        %494 = vmatprep.mubr.f32.mxu0 0.0
        %495 = vmatmul.mubr.f32.gmra.mrb[0].mxu0 %v358
        %v496 = vpop.f32.mrb[0].mxu0
        %v497 = vadd.f32 0.0, %v496
        %v498 = vpop.f32.mrb[0].mxu0
        %499 = vdwg.mxu0
        %500 = vmatprep.subr.mxu0 0.0
        %501 = vmatpush1.msra.mxu0 %v351
        %502 = vmatprep.subr.mxu0 0.0
        %503 = vmatpush1.msra.mxu0 %v352
        %504 = vmatprep.subr.mxu0 0.0
        %505 = vmatpush1.msra.mxu0 %v353
        %506 = vmatprep.subr.mxu0 0.0
        %507 = vmatpush1.msra.mxu0 %v354
        %508 = vmatprep.subr.mxu0 0.0
        %509 = vmatpush1.msra.mxu0 0.0
        %510 = vmatprep.subr.mxu0 0.0
        %511 = vmatpush1.msra.mxu0 0.0
        %512 = vmatprep.subr.mxu0 0.0
        %513 = vmatpush1.msra.mxu0 0.0
        %514 = vmatprep.subr.mxu0 0.0
        %515 = vmatpush1.msra.mxu0 0.0
        %516 = vmatprep.subr.mxu0 0.0
        %517 = vmatpush1.msra.mxu0 0.0
        %518 = vmatprep.subr.mxu0 0.0
        %519 = vmatpush1.msra.mxu0 0.0
        %520 = vmatprep.subr.mxu0 0.0
        %521 = vmatpush1.msra.mxu0 0.0
        %522 = vmatprep.subr.mxu0 0.0
        %523 = vmatpush1.msra.mxu0 0.0
        %524 = vmatprep.subr.mxu0 0.0
        %525 = vmatpush1.msra.mxu0 0.0
        %526 = vmatprep.subr.mxu0 0.0
        %527 = vmatpush1.msra.mxu0 0.0
        %528 = vmatprep.subr.mxu0 0.0
        %529 = vmatpush1.msra.mxu0 0.0
        %530 = vmatprep.subr.mxu0 0.0
        %531 = vmatpush1.msra.mxu0 0.0
        %532 = vmatprep.subr.mxu0 0.0
        %533 = vmatpush1.msra.mxu0 0.0
        %534 = vmatprep.subr.mxu0 0.0
        %535 = vmatpush1.msra.mxu0 0.0
        %536 = vmatprep.subr.mxu0 0.0
        %537 = vmatpush1.msra.mxu0 0.0
        %538 = vmatprep.subr.mxu0 0.0
        %539 = vmatpush1.msra.mxu0 0.0
        %540 = vmatprep.subr.mxu0 0.0
        %541 = vmatpush1.msra.mxu0 0.0
        %542 = vmatprep.subr.mxu0 0.0
        %543 = vmatpush1.msra.mxu0 0.0
        %544 = vmatprep.subr.mxu0 0.0
        %545 = vmatpush1.msra.mxu0 0.0
        %546 = vmatprep.subr.mxu0 0.0
        %547 = vmatpush1.msra.mxu0 0.0
        %548 = vmatprep.subr.mxu0 0.0
        %549 = vmatpush1.msra.mxu0 0.0
        %550 = vmatprep.subr.mxu0 0.0
        %551 = vmatpush1.msra.mxu0 0.0
        %552 = vmatprep.subr.mxu0 0.0
        %553 = vmatpush1.msra.mxu0 0.0
        %554 = vmatprep.subr.mxu0 0.0
        %555 = vmatpush1.msra.mxu0 0.0
        %556 = vmatprep.subr.mxu0 0.0
        %557 = vmatpush1.msra.mxu0 0.0
        %558 = vmatprep.subr.mxu0 0.0
        %559 = vmatpush1.msra.mxu0 0.0
        %560 = vmatprep.subr.mxu0 0.0
        %561 = vmatpush1.msra.mxu0 0.0
        %562 = vmatprep.subr.mxu0 0.0
        %563 = vmatpush1.msra.mxu0 0.0
        %564 = vmatprep.mubr.f32.mxu0 0.0
        %565 = vmatmul.mubr.f32.gmra.mrb[0].mxu0 %v358
        %v566 = vpop.f32.mrb[0].mxu0
        %v567 = vadd.f32 0.0, %v566
        %v568 = vpop.f32.mrb[0].mxu0
        %569 = vdwg.mxu0
        %v570 = vmul.f32 %v427, 0.5
        %vm571 = vcmask 31744
        %v573 = vsel %vm571, %v570, 0
        %v576 = vsel %vm571, %v497, 0
        %578 = vmatprep.subr.mxu0 0.0
        %579 = vmatpush1.xpose.msra.mxu0 %v576
        %580 = vmatprep.subr.mxu0 0.0
        %581 = vmatpush1.xpose.msra.mxu0 0.0
        %582 = vmatprep.subr.mxu0 0.0
        %583 = vmatpush1.xpose.msra.mxu0 0.0
        %584 = vmatprep.subr.mxu0 0.0
        %585 = vmatpush1.xpose.msra.mxu0 0.0
        %586 = vmatprep.subr.mxu0 0.0
        %587 = vmatpush1.xpose.msra.mxu0 0.0
        %588 = vmatprep.subr.mxu0 0.0
        %589 = vmatpush1.xpose.msra.mxu0 0.0
        %590 = vmatprep.subr.mxu0 0.0
        %591 = vmatpush1.xpose.msra.mxu0 0.0
        %592 = vmatprep.subr.mxu0 0.0
        %593 = vmatpush1.xpose.msra.mxu0 0.0
        %594 = vmatprep.subr.mxu0 0.0
        %595 = vmatpush1.xpose.msra.mxu0 0.0
        %596 = vmatprep.subr.mxu0 0.0
        %597 = vmatpush1.xpose.msra.mxu0 0.0
        %598 = vmatprep.subr.mxu0 0.0
        %599 = vmatpush1.xpose.msra.mxu0 0.0
        %600 = vmatprep.subr.mxu0 0.0
        %601 = vmatpush1.xpose.msra.mxu0 0.0
        %602 = vmatprep.subr.mxu0 0.0
        %603 = vmatpush1.xpose.msra.mxu0 0.0
        %604 = vmatprep.subr.mxu0 0.0
        %605 = vmatpush1.xpose.msra.mxu0 0.0
        %606 = vmatprep.subr.mxu0 0.0
        %607 = vmatpush1.xpose.msra.mxu0 0.0
        %608 = vmatprep.subr.mxu0 0.0
        %609 = vmatpush1.xpose.msra.mxu0 0.0
        %610 = vmatprep.subr.mxu0 0.0
        %611 = vmatpush1.xpose.msra.mxu0 0.0
        %612 = vmatprep.subr.mxu0 0.0
        %613 = vmatpush1.xpose.msra.mxu0 0.0
        %614 = vmatprep.subr.mxu0 0.0
        %615 = vmatpush1.xpose.msra.mxu0 0.0
        %616 = vmatprep.subr.mxu0 0.0
        %617 = vmatpush1.xpose.msra.mxu0 0.0
        %618 = vmatprep.subr.mxu0 0.0
        %619 = vmatpush1.xpose.msra.mxu0 0.0
        %620 = vmatprep.subr.mxu0 0.0
        %621 = vmatpush1.xpose.msra.mxu0 0.0
        %622 = vmatprep.subr.mxu0 0.0
        %623 = vmatpush1.xpose.msra.mxu0 0.0
        %624 = vmatprep.subr.mxu0 0.0
        %625 = vmatpush1.xpose.msra.mxu0 0.0
        %626 = vmatprep.subr.mxu0 0.0
        %627 = vmatpush1.xpose.msra.mxu0 0.0
        %628 = vmatprep.subr.mxu0 0.0
        %629 = vmatpush1.xpose.msra.mxu0 0.0
        %630 = vmatprep.subr.mxu0 0.0
        %631 = vmatpush1.xpose.msra.mxu0 0.0
        %632 = vmatprep.subr.mxu0 0.0
        %633 = vmatpush1.xpose.msra.mxu0 0.0
        %634 = vmatprep.subr.mxu0 0.0
        %635 = vmatpush1.xpose.msra.mxu0 0.0
        %636 = vmatprep.subr.mxu0 0.0
        %637 = vmatpush1.xpose.msra.mxu0 0.0
        %638 = vmatprep.subr.mxu0 0.0
        %639 = vmatpush1.xpose.msra.mxu0 0.0
        %640 = vmatprep.subr.mxu0 0.0
        %641 = vmatpush1.xpose.msra.mxu0 0.0
        %642 = vmatprep.mubr.f32.mxu0 0.0
        %643 = vmatmul.mubr.f32.gmra.mrb[0].mxu0 %v573
        %v644 = vpop.f32.mrb[0].mxu0
        %v645 = vadd.f32 0.0, %v644
        %v646 = vpop.f32.mrb[0].mxu0
        %647 = vdwg.mxu0
        %vm648 = vcmask 64512
        %v649 = vsel %vm648, %v645, -inf
        %650 = vmax.xlane.f32.xlu0 %v649
        %v651 = vpop.xlane.xlu0 %650
        %v652 = vsub.f32 %v645, %v651
        %v653 = vmul.f32 %v652, 1.442695
        %v654 = vpow.pop %v653
        %v655 = vsel %vm648, %v654, 0.0
        %656 = vadd.xlane.f32.xlu0 %v655
        %v657 = vpop.xlane.xlu0 %656
        %v658 = vrcp.pop %v657
        %v659 = vmul.f32 %v654, %v658
        %v661 = vsel %vm648, %v659, 0
        %663 = vmatprep.subr.mxu0 0.0
        %664 = vmatpush1.msra.mxu0 %v567
        %665 = vmatprep.subr.mxu0 0.0
        %666 = vmatpush1.msra.mxu0 0.0
        %667 = vmatprep.subr.mxu0 0.0
        %668 = vmatpush1.msra.mxu0 0.0
        %669 = vmatprep.subr.mxu0 0.0
        %670 = vmatpush1.msra.mxu0 0.0
        %671 = vmatprep.subr.mxu0 0.0
        %672 = vmatpush1.msra.mxu0 0.0
        %673 = vmatprep.subr.mxu0 0.0
        %674 = vmatpush1.msra.mxu0 0.0
        %675 = vmatprep.subr.mxu0 0.0
        %676 = vmatpush1.msra.mxu0 0.0
        %677 = vmatprep.subr.mxu0 0.0
        %678 = vmatpush1.msra.mxu0 0.0
        %679 = vmatprep.subr.mxu0 0.0
        %680 = vmatpush1.msra.mxu0 0.0
        %681 = vmatprep.subr.mxu0 0.0
        %682 = vmatpush1.msra.mxu0 0.0
        %683 = vmatprep.subr.mxu0 0.0
        %684 = vmatpush1.msra.mxu0 0.0
        %685 = vmatprep.subr.mxu0 0.0
        %686 = vmatpush1.msra.mxu0 0.0
        %687 = vmatprep.subr.mxu0 0.0
        %688 = vmatpush1.msra.mxu0 0.0
        %689 = vmatprep.subr.mxu0 0.0
        %690 = vmatpush1.msra.mxu0 0.0
        %691 = vmatprep.subr.mxu0 0.0
        %692 = vmatpush1.msra.mxu0 0.0
        %693 = vmatprep.subr.mxu0 0.0
        %694 = vmatpush1.msra.mxu0 0.0
        %695 = vmatprep.subr.mxu0 0.0
        %696 = vmatpush1.msra.mxu0 0.0
        %697 = vmatprep.subr.mxu0 0.0
        %698 = vmatpush1.msra.mxu0 0.0
        %699 = vmatprep.subr.mxu0 0.0
        %700 = vmatpush1.msra.mxu0 0.0
        %701 = vmatprep.subr.mxu0 0.0
        %702 = vmatpush1.msra.mxu0 0.0
        %703 = vmatprep.subr.mxu0 0.0
        %704 = vmatpush1.msra.mxu0 0.0
        %705 = vmatprep.subr.mxu0 0.0
        %706 = vmatpush1.msra.mxu0 0.0
        %707 = vmatprep.subr.mxu0 0.0
        %708 = vmatpush1.msra.mxu0 0.0
        %709 = vmatprep.subr.mxu0 0.0
        %710 = vmatpush1.msra.mxu0 0.0
        %711 = vmatprep.subr.mxu0 0.0
        %712 = vmatpush1.msra.mxu0 0.0
        %713 = vmatprep.subr.mxu0 0.0
        %714 = vmatpush1.msra.mxu0 0.0
        %715 = vmatprep.subr.mxu0 0.0
        %716 = vmatpush1.msra.mxu0 0.0
        %717 = vmatprep.subr.mxu0 0.0
        %718 = vmatpush1.msra.mxu0 0.0
        %719 = vmatprep.subr.mxu0 0.0
        %720 = vmatpush1.msra.mxu0 0.0
        %721 = vmatprep.subr.mxu0 0.0
        %722 = vmatpush1.msra.mxu0 0.0
        %723 = vmatprep.subr.mxu0 0.0
        %724 = vmatpush1.msra.mxu0 0.0
        %725 = vmatprep.subr.mxu0 0.0
        %726 = vmatpush1.msra.mxu0 0.0
        %727 = vmatprep.mubr.f32.mxu0 0.0
        %728 = vmatmul.mubr.f32.gmra.mrb[0].mxu0 %v661
        %v729 = vpop.f32.mrb[0].mxu0
        %v730 = vadd.f32 0.0, %v729
        %v731 = vpop.f32.mrb[0].mxu0
        %732 = vdwg.mxu0
        %v733 = vld [vmem:[#allocation2] sm:$0xff]
        %v735 = vsel %vm571, %v730, 0
        %vm737 = vcmask 1043456
        %v739 = vsel %vm737, %v355, 0
        %741 = vmatprep.subr.mxu0 0.0
        %742 = vmatpush1.msra.mxu0 %v739
        %743 = vmatprep.subr.mxu0 0.0
        %744 = vmatpush1.msra.mxu0 0.0
        %745 = vmatprep.subr.mxu0 0.0
        %746 = vmatpush1.msra.mxu0 0.0
        %747 = vmatprep.subr.mxu0 0.0
        %748 = vmatpush1.msra.mxu0 0.0
        %749 = vmatprep.subr.mxu0 0.0
        %750 = vmatpush1.msra.mxu0 0.0
        %751 = vmatprep.subr.mxu0 0.0
        %752 = vmatpush1.msra.mxu0 0.0
        %753 = vmatprep.subr.mxu0 0.0
        %754 = vmatpush1.msra.mxu0 0.0
        %755 = vmatprep.subr.mxu0 0.0
        %756 = vmatpush1.msra.mxu0 0.0
        %757 = vmatprep.subr.mxu0 0.0
        %758 = vmatpush1.msra.mxu0 0.0
        %759 = vmatprep.subr.mxu0 0.0
        %760 = vmatpush1.msra.mxu0 0.0
        %761 = vmatprep.subr.mxu0 0.0
        %762 = vmatpush1.msra.mxu0 0.0
        %763 = vmatprep.subr.mxu0 0.0
        %764 = vmatpush1.msra.mxu0 0.0
        %765 = vmatprep.subr.mxu0 0.0
        %766 = vmatpush1.msra.mxu0 0.0
        %767 = vmatprep.subr.mxu0 0.0
        %768 = vmatpush1.msra.mxu0 0.0
        %769 = vmatprep.subr.mxu0 0.0
        %770 = vmatpush1.msra.mxu0 0.0
        %771 = vmatprep.subr.mxu0 0.0
        %772 = vmatpush1.msra.mxu0 0.0
        %773 = vmatprep.subr.mxu0 0.0
        %774 = vmatpush1.msra.mxu0 0.0
        %775 = vmatprep.subr.mxu0 0.0
        %776 = vmatpush1.msra.mxu0 0.0
        %777 = vmatprep.subr.mxu0 0.0
        %778 = vmatpush1.msra.mxu0 0.0
        %779 = vmatprep.subr.mxu0 0.0
        %780 = vmatpush1.msra.mxu0 0.0
        %781 = vmatprep.subr.mxu0 0.0
        %782 = vmatpush1.msra.mxu0 0.0
        %783 = vmatprep.subr.mxu0 0.0
        %784 = vmatpush1.msra.mxu0 0.0
        %785 = vmatprep.subr.mxu0 0.0
        %786 = vmatpush1.msra.mxu0 0.0
        %787 = vmatprep.subr.mxu0 0.0
        %788 = vmatpush1.msra.mxu0 0.0
        %789 = vmatprep.subr.mxu0 0.0
        %790 = vmatpush1.msra.mxu0 0.0
        %791 = vmatprep.subr.mxu0 0.0
        %792 = vmatpush1.msra.mxu0 0.0
        %793 = vmatprep.subr.mxu0 0.0
        %794 = vmatpush1.msra.mxu0 0.0
        %795 = vmatprep.subr.mxu0 0.0
        %796 = vmatpush1.msra.mxu0 0.0
        %797 = vmatprep.subr.mxu0 0.0
        %798 = vmatpush1.msra.mxu0 0.0
        %799 = vmatprep.subr.mxu0 0.0
        %800 = vmatpush1.msra.mxu0 0.0
        %801 = vmatprep.subr.mxu0 0.0
        %802 = vmatpush1.msra.mxu0 0.0
        %803 = vmatprep.subr.mxu0 0.0
        %804 = vmatpush1.msra.mxu0 0.0
        %805 = vmatprep.mubr.f32.mxu0 0.0
        %806 = vmatmul.mubr.f32.gmra.mrb[0].mxu0 %v735
        %v807 = vpop.f32.mrb[0].mxu0
        %v808 = vadd.f32 0.0, %v807
        %v809 = vpop.f32.mrb[0].mxu0
        %810 = vdwg.mxu0
        %v811 = vadd.f32 %v733, %v808
        %812 = vst.msk [vmem:[#allocation2] sm:$0xff] %vm356, %v811
        %p813 = scmp.eq.s32.totalorder %s25, 7
        // Predicated region
        $region49: #{tpu_custom_call.1} parent=43 // pred_check
          %p814 = pneg %p813
        $region50: #{tpu_custom_call.1} parent=43 // pred_check_branch
          %816 = sbr.rel (%p814) target = $region52
        $region51: #{tpu_custom_call.1} parent=43 // pred_region
          %v817 = vld [vmem:[#allocation2] sm:$0xff]
          %v818 = vld [vmem:[%s5] sm:$0x1]
          %v820 = vlaneseq
          %v821 = vshrl.u32 %v820, 7
          %v822 = vsub.s32 0, %v821
          %v823 = vrot.slane %v818, %v822
          %v825 = vadd.f32 %v817, %v823
          %826 = vst.msk [vmem:[%s312] sm:$0xff] %vm356, %v825
        $region52: #{tpu_custom_call.1} parent=43 // pred_fallthru
          _
        %s827 = sand.u32 %s191, 1
        %s828 = scalar_lea.sflag [#allocation4], %s827
        %s829 = sand.u32 %s191, 1
        %s830 = smul.addr %s829, 8
        %s831 = scalar_lea.vmem [#allocation3], %s830
        // Predicated region
        $region53: #{tpu_custom_call.1} parent=43 // pred_check
          %p832 = pneg %p201
        $region54: #{tpu_custom_call.1} parent=43 // pred_check_branch
          %834 = sbr.rel (%p832) target = $region56
        $region55: #{tpu_custom_call.1} parent=43 // pred_region
          %s836 = ssub.s32 128, 128
          %837 = vsyncadd %s828, %s836
          %s838 = smul.addr %s24, 128
          %s839 = scalar_lea.hbm %s6, %s838
          %s841 = sshll.u32 %s831, 4
          %s842 = int_to_ptr.vmem [resolvable:$true] %s841
          %844 = dma.vmem_to_hbm [thread:$0]  %s842, 128, %s839, %s828
        $region56: #{tpu_custom_call.1} parent=43 // pred_fallthru
          _
      $region44: #{tpu_custom_call.1} parent=5 // pred_fallthru
        _
      %p845 = scmp.le.s32.totalorder 2, %s15
      // Predicated region
      $region57: #{tpu_custom_call.1} parent=5 // pred_check
        %p846 = pneg %p845
      $region58: #{tpu_custom_call.1} parent=5 // pred_check_branch
        %848 = sbr.rel (%p846) target = $region60
      $region59: #{tpu_custom_call.1} parent=5 // pred_region
        %s849 = ssub.s32 %s15, 2
        // Predicated region
        $region61: #{tpu_custom_call.1} parent=59 // pred_check
          %p850 = pneg %p207
        $region62: #{tpu_custom_call.1} parent=59 // pred_check_branch
          %852 = sbr.rel (%p850) target = $region64
        $region63: #{tpu_custom_call.1} parent=59 // pred_region
          %s853 = sand.u32 %s192, 1
          %s854 = scalar_lea.sflag [#allocation4], %s853
          %s855 = sand.u32 %s192, 1
          %s856 = smul.addr %s855, 8
          %s857 = scalar_lea.vmem [#allocation3], %s856
          %858 = dma.done %s854, 128
        $region64: #{tpu_custom_call.1} parent=59 // pred_fallthru
          _
      $region60: #{tpu_custom_call.1} parent=5 // pred_fallthru
        _
    $region6: #{tpu_custom_call.1} parent=1 // loop_footer
      %s19 = sadd.s32 1, %s15
    $region7: #{tpu_custom_call.1} parent=1 // loop_footer_branch
      %14 = sbr.rel target = $region3
    $region8: #{tpu_custom_call.1} parent=1 // loop_exit
      _
    %859 = vsyncpa [#allocation4], 1
    %s860 = scalar_lea.sflag [#allocation4], 1
    %861 = vsyncpa %s860, 1

</llo_original>
